<compile_context>
chip_gen: v7x
topology: tpu7x:2x2x1
jax: 0.10.0
libtpu: 0.0.40
codegen_flags: <defaults>
</compile_context>

<pallas_src>
import functools

import jax
import jax.numpy as jnp
from jax import lax
from jax.experimental import pallas as pl
from jax.experimental.pallas import tpu as pltpu


def tabm_kernel(x_ref, w_ref, b_ref, we_ref, s_ref, ab_ref, hw_ref, ob_ref,
                out_ref, *, k):
    """One batch tile; K folded into lanes / contraction depth.

    x_ref  : (TB, H_in=I)   bf16   batch tile of the input
    w_ref  : (H, I)         bf16   shared Linear weight (PyTorch layout)
    b_ref  : (1, H)         f32    shared Linear bias
    we_ref : (H, K*I)       bf16   effective adapter weight  r[k,h] * W[h,i]
    s_ref  : (1, K*I)       f32    adapters_s, flattened lane-wise
    ab_ref : (1, K*I)       f32    adapter bias, flattened lane-wise
    hw_ref : (O, K*I)       bf16   head weights, packed 2-D (contract dim 1)
    ob_ref : (1, O)         f32    mean_k(head_b), pre-reduced on host
    out_ref: (TB, O)        f32
    """
    # Shared layer: relu(x @ W^T + b).  Contract x dim 1 with W dim 1 so the single
    # (H, I) PyTorch-layout buffer is used directly (no transposed duplicate).
    xs = lax.dot_general(x_ref[...], w_ref[...],
                         dimension_numbers=(((1,), (1,)), ((), ())),
                         preferred_element_type=jnp.float32)            # (TB, H) f32
    xs = jnp.maximum(xs + b_ref[...], 0.0)

    # Adapter path: one lane-dense MXU pass, (TB, H) @ (H, K*I).
    xa = jnp.dot(xs.astype(we_ref.dtype), we_ref[...],
                 preferred_element_type=jnp.float32)                    # (TB, K*I) f32
    xa = xa * s_ref[...] + ab_ref[...]                                  # lane-dense VPU, f32

    # Heads + mean over K: one matmul with a K*I-deep contraction, then 1/K in f32.
    out = lax.dot_general(xa.astype(hw_ref.dtype), hw_ref[...],
                          dimension_numbers=(((1,), (1,)), ((), ())),
                          preferred_element_type=jnp.float32)           # (TB, O) f32
    out_ref[...] = (out * (1.0 / k) + ob_ref[...]).astype(out_ref.dtype)


def tabm_forward(x, shared_w, shared_b, adapters_r, adapters_s, adapter_bias,
                 head_w, head_b, *, batch_tile=None, mxu_dtype=jnp.bfloat16):
    """Pallas TabM forward.

    x            : (B, I)
    shared_w     : (H, I)    PyTorch Linear layout
    shared_b     : (H,)
    adapters_r   : (K, H)
    adapters_s   : (K, I)
    adapter_bias : (K, I)
    head_w       : (K, O, I) PyTorch Linear layout
    head_b       : (K, O)
    returns (B, O) float32
    """
    B, I = x.shape
    H = shared_w.shape[0]
    K, O, _ = head_w.shape
    KI = K * I

    # Demo-sized batches: single grid step (per-step overhead dominates otherwise).
    # Production: pick the largest TB that fits VMEM; on v7x keep B//TB a multiple of 2.
    TB = B if batch_tile is None else batch_tile
    assert B % TB == 0, "batch must be divisible by the batch tile"
    assert TB % 8 == 0, "batch tile must be a multiple of 8 (sublane alignment)"

    # ---- wrapper-side layout glue (casts / reshapes / small host math only) ----
    x_c = x.astype(mxu_dtype)                                           # (B, I)
    w_c = shared_w.astype(mxu_dtype)                                    # (H, I)
    b2 = shared_b.reshape(1, H).astype(jnp.float32)                     # (1, H)

    # Effective adapter weight: W'[h, k*I + i] = r[k, h] * W[h, i]   (f32 product -> bf16)
    w_eff = (adapters_r.astype(jnp.float32).T[:, :, None]
             * shared_w.astype(jnp.float32)[:, None, :])                # (H, K, I)
    w_eff = w_eff.reshape(H, KI).astype(mxu_dtype)                      # (H, K*I)

    s_flat = adapters_s.reshape(1, KI).astype(jnp.float32)              # (1, K*I)
    ab_flat = adapter_bias.reshape(1, KI).astype(jnp.float32)           # (1, K*I)

    # Head weights packed 2-D: hw2[o, k*I + i] = head_w[k, o, i]
    hw2 = jnp.transpose(head_w, (1, 0, 2)).reshape(O, KI).astype(mxu_dtype)  # (O, K*I)
    # 1/K is applied in f32 inside the kernel (not folded into bf16 weights).
    ob = jnp.mean(head_b.astype(jnp.float32), axis=0, keepdims=True)    # (1, O)

    grid_spec = pltpu.PrefetchScalarGridSpec(
        num_scalar_prefetch=0,
        grid=(B // TB,),                                   # batch-tile axis only
        in_specs=[
            pl.BlockSpec((TB, I), lambda i: (i, 0)),       # x (batch-tiled)
            pl.BlockSpec((H, I), lambda i: (0, 0)),        # shared weight
            pl.BlockSpec((1, H), lambda i: (0, 0)),        # shared bias
            pl.BlockSpec((H, KI), lambda i: (0, 0)),       # effective adapter weight
            pl.BlockSpec((1, KI), lambda i: (0, 0)),       # adapters_s (lane-flattened)
            pl.BlockSpec((1, KI), lambda i: (0, 0)),       # adapter bias (lane-flattened)
            pl.BlockSpec((O, KI), lambda i: (0, 0)),       # head weights, 2-D packed
            pl.BlockSpec((1, O), lambda i: (0, 0)),        # mean head bias
        ],
        out_specs=pl.BlockSpec((TB, O), lambda i: (i, 0)),
    )

    return pl.pallas_call(
        functools.partial(tabm_kernel, k=K),
        out_shape=jax.ShapeDtypeStruct((B, O), jnp.float32),
        grid_spec=grid_spec,
        compiler_params=pltpu.CompilerParams(
            # Batch tiles are independent -> safe to shard across v7x TensorCores.
            dimension_semantics=("parallel",),
            # Live intermediates scale as TB*K*I*4 B (~2 KB/row at these dims);
            # conservative explicit limit, well under v7x's 64 MiB.
            vmem_limit_bytes=32 * 1024 * 1024,
        ),
    )(x_c, w_c, b2, w_eff, s_flat, ab_flat, hw2, ob)


def tabm_reference(x, shared_w, shared_b, adapters_r, adapters_s, adapter_bias,
                   head_w, head_b):
    # Pure-JAX f32 mirror of the PyTorch forward, for correctness checking.
    xs = jax.nn.relu(x @ shared_w.T + shared_b)                    # (B, H)
    x_exp = xs[:, None, :] * adapters_r[None, :, :]                # (B, K, H)
    xa = jnp.einsum('bkh,hi->bki', x_exp, shared_w)                # (B, K, I)
    xa = xa * adapters_s[None] + adapter_bias[None]                # (B, K, I)
    outs = jnp.einsum('bki,koi->bko', xa, head_w) + head_b[None]   # (B, K, O)
    return jnp.mean(outs, axis=1)                                  # (B, O)


if __name__ == "__main__":
    # Small shapes consistent with the module's forward.
    B, INPUT_DIM, HIDDEN_DIM, OUTPUT_DIM, K = 64, 16, 32, 4, 32

    key = jax.random.PRNGKey(0)
    ks = jax.random.split(key, 8)
    shared_w = jax.random.normal(ks[0], (HIDDEN_DIM, INPUT_DIM), jnp.float32) * 0.1
    shared_b = jax.random.normal(ks[1], (HIDDEN_DIM,), jnp.float32) * 0.1
    adapters_r = jax.random.normal(ks[2], (K, HIDDEN_DIM), jnp.float32)
    adapters_s = jax.random.normal(ks[3], (K, INPUT_DIM), jnp.float32)
    adapter_bias = jax.random.normal(ks[4], (K, INPUT_DIM), jnp.float32)
    head_w = jax.random.normal(ks[5], (K, OUTPUT_DIM, INPUT_DIM), jnp.float32) * 0.1
    head_b = jax.random.normal(ks[6], (K, OUTPUT_DIM), jnp.float32) * 0.1
    x = jax.random.normal(ks[7], (B, INPUT_DIM), jnp.float32)

    # Demo batch: single grid step (batch_tile=None -> TB = B).
    out = tabm_forward(x, shared_w, shared_b, adapters_r, adapters_s,
                       adapter_bias, head_w, head_b)
    out = jax.block_until_ready(out)

    ref = tabm_reference(x, shared_w, shared_b, adapters_r, adapters_s,
                         adapter_bias, head_w, head_b)
    assert out.shape == (B, OUTPUT_DIM)
    # bf16 MXU operands (x, W, r*W, heads) with f32 accumulation vs. a pure-f32
    # reference -> ~1e-3 abs error at these magnitudes; 2e-2 leaves a wide margin.
    assert jnp.allclose(out, ref, rtol=2e-2, atol=2e-2), (out, ref)

    print("KERNEL_OK")
</pallas_src>

<mosaic_0001>
module attributes {stable_mosaic.version = 11 : i64} {
  func.func @tabm_kernel(%arg0: i32, %arg1: memref<64x16xbf16, #tpu.memory_space<vmem>>, %arg2: memref<32x16xbf16, #tpu.memory_space<vmem>>, %arg3: memref<1x32xf32, #tpu.memory_space<vmem>>, %arg4: memref<32x512xbf16, #tpu.memory_space<vmem>>, %arg5: memref<1x512xf32, #tpu.memory_space<vmem>>, %arg6: memref<1x512xf32, #tpu.memory_space<vmem>>, %arg7: memref<4x512xbf16, #tpu.memory_space<vmem>>, %arg8: memref<1x4xf32, #tpu.memory_space<vmem>>, %arg9: memref<64x4xf32, #tpu.memory_space<vmem>>) attributes {dimension_semantics = [#tpu.dimension_semantics<parallel>], iteration_bounds = array<i64: 1>, scalar_prefetch = 0 : i64, scratch_operands = 0 : i64, tpu.core_type = #tpu.core_type<tc>, window_params = [{transform_indices = @transform_0, window_bounds = array<i64: 64, 16>}, {pipeline_mode = #tpu.pipeline_mode<synchronous>, transform_indices = @transform_1, window_bounds = array<i64: 32, 16>}, {pipeline_mode = #tpu.pipeline_mode<synchronous>, transform_indices = @transform_2, window_bounds = array<i64: 1, 32>}, {pipeline_mode = #tpu.pipeline_mode<synchronous>, transform_indices = @transform_3, window_bounds = array<i64: 32, 512>}, {pipeline_mode = #tpu.pipeline_mode<synchronous>, transform_indices = @transform_4, window_bounds = array<i64: 1, 512>}, {pipeline_mode = #tpu.pipeline_mode<synchronous>, transform_indices = @transform_5, window_bounds = array<i64: 1, 512>}, {pipeline_mode = #tpu.pipeline_mode<synchronous>, transform_indices = @transform_6, window_bounds = array<i64: 4, 512>}, {pipeline_mode = #tpu.pipeline_mode<synchronous>, transform_indices = @transform_7, window_bounds = array<i64: 1, 4>}, {transform_indices = @transform_8, window_bounds = array<i64: 64, 4>}]} {
    %c0 = arith.constant 0 : index
    %c0_0 = arith.constant 0 : index
    %0 = vector.load %arg1[%c0, %c0_0] : memref<64x16xbf16, #tpu.memory_space<vmem>>, vector<64x16xbf16>
    %c0_1 = arith.constant 0 : index
    %c0_2 = arith.constant 0 : index
    %1 = vector.load %arg2[%c0_1, %c0_2] : memref<32x16xbf16, #tpu.memory_space<vmem>>, vector<32x16xbf16>
    %cst = arith.constant dense<0.000000e+00> : vector<64x32xf32>
    %2 = tpu.matmul %0, %1, %cst {dimension_numbers = #tpu.dot_dimension_numbers<[1], [1], [0], [0], [0, 0, 1, 0], [], []>} : vector<64x16xbf16>, vector<32x16xbf16>, vector<64x32xf32> -> vector<64x32xf32>
    %c0_3 = arith.constant 0 : index
    %c0_4 = arith.constant 0 : index
    %3 = vector.load %arg3[%c0_3, %c0_4] : memref<1x32xf32, #tpu.memory_space<vmem>>, vector<1x32xf32>
    %4 = vector.broadcast %3 : vector<1x32xf32> to vector<64x32xf32>
    %5 = arith.addf %2, %4 : vector<64x32xf32>
    %cst_5 = arith.constant 0.000000e+00 : f32
    %6 = vector.broadcast %cst_5 : f32 to vector<64x32xf32>
    %7 = arith.maximumf %5, %6 : vector<64x32xf32>
    %8 = arith.truncf %7 : vector<64x32xf32> to vector<64x32xbf16>
    %c0_6 = arith.constant 0 : index
    %c0_7 = arith.constant 0 : index
    %9 = vector.load %arg4[%c0_6, %c0_7] : memref<32x512xbf16, #tpu.memory_space<vmem>>, vector<32x512xbf16>
    %cst_8 = arith.constant dense<0.000000e+00> : vector<64x512xf32>
    %10 = tpu.matmul %8, %9, %cst_8 {dimension_numbers = #tpu.dot_dimension_numbers<[1], [0], [0], [1], [0, 0, 1, 1], [], []>} : vector<64x32xbf16>, vector<32x512xbf16>, vector<64x512xf32> -> vector<64x512xf32>
    %c0_9 = arith.constant 0 : index
    %c0_10 = arith.constant 0 : index
    %11 = vector.load %arg5[%c0_9, %c0_10] : memref<1x512xf32, #tpu.memory_space<vmem>>, vector<1x512xf32>
    %12 = vector.broadcast %11 : vector<1x512xf32> to vector<64x512xf32>
    %13 = arith.mulf %10, %12 : vector<64x512xf32>
    %c0_11 = arith.constant 0 : index
    %c0_12 = arith.constant 0 : index
    %14 = vector.load %arg6[%c0_11, %c0_12] : memref<1x512xf32, #tpu.memory_space<vmem>>, vector<1x512xf32>
    %15 = vector.broadcast %14 : vector<1x512xf32> to vector<64x512xf32>
    %16 = arith.addf %13, %15 : vector<64x512xf32>
    %17 = arith.truncf %16 : vector<64x512xf32> to vector<64x512xbf16>
    %c0_13 = arith.constant 0 : index
    %c0_14 = arith.constant 0 : index
    %18 = vector.load %arg7[%c0_13, %c0_14] : memref<4x512xbf16, #tpu.memory_space<vmem>>, vector<4x512xbf16>
    %cst_15 = arith.constant dense<0.000000e+00> : vector<64x4xf32>
    %19 = tpu.matmul %17, %18, %cst_15 {dimension_numbers = #tpu.dot_dimension_numbers<[1], [1], [0], [0], [0, 0, 1, 0], [], []>} : vector<64x512xbf16>, vector<4x512xbf16>, vector<64x4xf32> -> vector<64x4xf32>
    %cst_16 = arith.constant 3.125000e-02 : f32
    %20 = vector.broadcast %cst_16 : f32 to vector<64x4xf32>
    %21 = arith.mulf %19, %20 : vector<64x4xf32>
    %c0_17 = arith.constant 0 : index
    %c0_18 = arith.constant 0 : index
    %22 = vector.load %arg8[%c0_17, %c0_18] : memref<1x4xf32, #tpu.memory_space<vmem>>, vector<1x4xf32>
    %23 = vector.broadcast %22 : vector<1x4xf32> to vector<64x4xf32>
    %24 = arith.addf %21, %23 : vector<64x4xf32>
    %c0_19 = arith.constant 0 : index
    %c0_20 = arith.constant 0 : index
    %25 = vector.load %arg9[%c0_19, %c0_20] : memref<64x4xf32, #tpu.memory_space<vmem>>, vector<64x4xf32>
    tpu.vector_store %arg9[%c0_19, %c0_20], %24 {strides = array<i32>} : memref<64x4xf32, #tpu.memory_space<vmem>>, vector<64x4xf32>,
    return
  }
  func.func @transform_0(%arg0: i32) -> (i32, i32) {
    %c0_i32 = arith.constant 0 : i32
    %c0_i32_0 = arith.constant 0 : i32
    return %arg0, %c0_i32 : i32, i32
  }
  func.func @transform_1(%arg0: i32) -> (i32, i32) {
    %c0_i32 = arith.constant 0 : i32
    %c0_i32_0 = arith.constant 0 : i32
    %c0_i32_1 = arith.constant 0 : i32
    return %c0_i32, %c0_i32_0 : i32, i32
  }
  func.func @transform_2(%arg0: i32) -> (i32, i32) {
    %c0_i32 = arith.constant 0 : i32
    %c0_i32_0 = arith.constant 0 : i32
    %c0_i32_1 = arith.constant 0 : i32
    return %c0_i32, %c0_i32_0 : i32, i32
  }
  func.func @transform_3(%arg0: i32) -> (i32, i32) {
    %c0_i32 = arith.constant 0 : i32
    %c0_i32_0 = arith.constant 0 : i32
    %c0_i32_1 = arith.constant 0 : i32
    return %c0_i32, %c0_i32_0 : i32, i32
  }
  func.func @transform_4(%arg0: i32) -> (i32, i32) {
    %c0_i32 = arith.constant 0 : i32
    %c0_i32_0 = arith.constant 0 : i32
    %c0_i32_1 = arith.constant 0 : i32
    return %c0_i32, %c0_i32_0 : i32, i32
  }
  func.func @transform_5(%arg0: i32) -> (i32, i32) {
    %c0_i32 = arith.constant 0 : i32
    %c0_i32_0 = arith.constant 0 : i32
    %c0_i32_1 = arith.constant 0 : i32
    return %c0_i32, %c0_i32_0 : i32, i32
  }
  func.func @transform_6(%arg0: i32) -> (i32, i32) {
    %c0_i32 = arith.constant 0 : i32
    %c0_i32_0 = arith.constant 0 : i32
    %c0_i32_1 = arith.constant 0 : i32
    return %c0_i32, %c0_i32_0 : i32, i32
  }
  func.func @transform_7(%arg0: i32) -> (i32, i32) {
    %c0_i32 = arith.constant 0 : i32
    %c0_i32_0 = arith.constant 0 : i32
    %c0_i32_1 = arith.constant 0 : i32
    return %c0_i32, %c0_i32_0 : i32, i32
  }
  func.func @transform_8(%arg0: i32) -> (i32, i32) {
    %c0_i32 = arith.constant 0 : i32
    %c0_i32_0 = arith.constant 0 : i32
    return %arg0, %c0_i32 : i32, i32
  }
}

</mosaic_0001>

<llo_original>
// kernel: tpu_custom_call.1
$region0: #{tpu_custom_call.1}
  #allocation0 [shape = 'u32[]', space=smem, size = 0x4, offset = 0x4, fixed_abs, tag = 'smem constant byte address 0x4 - core index']
  #allocation1 [shape = 'u32[144,128]{1,0:T(1,128)}', space=vmem, size = 0x12000, scoped, tag = 'internal scratch']
  %s0 = inlined_call_operand.vmem [shape: bf16[64,16], index: 0, kind: input, shape index: {}]
  %s1 = inlined_call_operand.vmem [shape: bf16[32,16], index: 1, kind: input, shape index: {}]
  %s2 = inlined_call_operand.vmem [shape: f32[1,32], index: 2, kind: input, shape index: {}]
  %s3 = inlined_call_operand.vmem [shape: bf16[32,512], index: 3, kind: input, shape index: {}]
  %s4 = inlined_call_operand.vmem [shape: f32[1,512], index: 4, kind: input, shape index: {}]
  %s5 = inlined_call_operand.vmem [shape: f32[1,512], index: 5, kind: input, shape index: {}]
  %s6 = inlined_call_operand.vmem [shape: bf16[4,512], index: 6, kind: input, shape index: {}]
  %s7 = inlined_call_operand.vmem [shape: f32[1,4], index: 7, kind: input, shape index: {}]
  %s8 = inlined_call_operand.vmem [shape: f32[64,4], index: 8, kind: output, shape index: {}]
  %s9 = sld [smem:[#allocation0]]
  $region42: #{tpu_custom_call.1} parent=0
    _
  %s11 = ssub.s32 1, %s9
  %s12 = scalar_select 0, %s11, %s9
  // Predicated region
  $region2: #{tpu_custom_call.1} parent=0 // pred_check
    _
  $region3: #{tpu_custom_call.1} parent=0 // pred_check_branch
    %14 = sbr.rel (0) target = $region5
  $region4: #{tpu_custom_call.1} parent=0 // pred_region
    _
  $region5: #{tpu_custom_call.1} parent=0 // pred_fallthru
    _
  // Predicated region
  $region6: #{tpu_custom_call.1} parent=0 // pred_check
    _
  $region7: #{tpu_custom_call.1} parent=0 // pred_check_branch
    %16 = sbr.rel (0) target = $region9
  $region8: #{tpu_custom_call.1} parent=0 // pred_region
    _
  $region9: #{tpu_custom_call.1} parent=0 // pred_fallthru
    _
  // Predicated region
  $region10: #{tpu_custom_call.1} parent=0 // pred_check
    _
  $region11: #{tpu_custom_call.1} parent=0 // pred_check_branch
    %18 = sbr.rel (0) target = $region13
  $region12: #{tpu_custom_call.1} parent=0 // pred_region
    _
  $region13: #{tpu_custom_call.1} parent=0 // pred_fallthru
    _
  // Predicated region
  $region14: #{tpu_custom_call.1} parent=0 // pred_check
    _
  $region15: #{tpu_custom_call.1} parent=0 // pred_check_branch
    %20 = sbr.rel (0) target = $region17
  $region16: #{tpu_custom_call.1} parent=0 // pred_region
    _
  $region17: #{tpu_custom_call.1} parent=0 // pred_fallthru
    _
  // Predicated region
  $region18: #{tpu_custom_call.1} parent=0 // pred_check
    _
  $region19: #{tpu_custom_call.1} parent=0 // pred_check_branch
    %22 = sbr.rel (0) target = $region21
  $region20: #{tpu_custom_call.1} parent=0 // pred_region
    _
  $region21: #{tpu_custom_call.1} parent=0 // pred_fallthru
    _
  // Predicated region
  $region22: #{tpu_custom_call.1} parent=0 // pred_check
    _
  $region23: #{tpu_custom_call.1} parent=0 // pred_check_branch
    %24 = sbr.rel (0) target = $region25
  $region24: #{tpu_custom_call.1} parent=0 // pred_region
    _
  $region25: #{tpu_custom_call.1} parent=0 // pred_fallthru
    _
  // Predicated region
  $region26: #{tpu_custom_call.1} parent=0 // pred_check
    _
  $region27: #{tpu_custom_call.1} parent=0 // pred_check_branch
    %26 = sbr.rel (0) target = $region29
  $region28: #{tpu_custom_call.1} parent=0 // pred_region
    _
  $region29: #{tpu_custom_call.1} parent=0 // pred_fallthru
    _
  // Predicated region
  $region30: #{tpu_custom_call.1} parent=0 // pred_check
    _
  $region31: #{tpu_custom_call.1} parent=0 // pred_check_branch
    %28 = sbr.rel (0) target = $region33
  $region32: #{tpu_custom_call.1} parent=0 // pred_region
    _
  $region33: #{tpu_custom_call.1} parent=0 // pred_fallthru
    _
  %v30 = vld [vmem:[%s0] sm:$0xf]
  %v31 = vld [vmem:[%s0 + $0x4] sm:$0xf]
  %v32 = vld [vmem:[%s0 + $0x8] sm:$0xf]
  %v33 = vld [vmem:[%s0 + $0xc] sm:$0xf]
  %v34 = vld [vmem:[%s0 + $0x10] sm:$0xf]
  %v35 = vld [vmem:[%s0 + $0x14] sm:$0xf]
  %v36 = vld [vmem:[%s0 + $0x18] sm:$0xf]
  %v37 = vld [vmem:[%s0 + $0x1c] sm:$0xf]
  %v38 = vld [vmem:[%s1] sm:$0xf]
  %v39 = vld [vmem:[%s1 + $0x4] sm:$0xf]
  %v40 = vld [vmem:[%s1 + $0x8] sm:$0xf]
  %v41 = vld [vmem:[%s1 + $0xc] sm:$0xf]
  %v42 = vld [vmem:[%s2] sm:$0x1]
  %v44 = vlaneseq
  %v45 = vshrl.u32 %v44, 7
  %v46 = vsub.s32 0, %v45
  %v47 = vrot.slane %v42, %v46
  %v57 = vunpack.c.l.b16 %v30
  %v58 = vunpack.c.l.b16 %v31
  %v59 = vunpack.c.l.b16 %v32
  %v60 = vunpack.c.l.b16 %v33
  %v61 = vunpack.c.l.b16 %v34
  %v62 = vunpack.c.l.b16 %v35
  %v63 = vunpack.c.l.b16 %v36
  %v64 = vunpack.c.l.b16 %v37
  %v65 = vpack.c.b16 %v58, %v57
  %v66 = vpack.c.b16 %v60, %v59
  %v67 = vpack.c.b16 %v62, %v61
  %v68 = vpack.c.b16 %v64, %v63
  %v73 = vunpack.c.l.b16 %v38
  %v74 = vunpack.c.l.b16 %v39
  %v75 = vunpack.c.l.b16 %v40
  %v76 = vunpack.c.l.b16 %v41
  %v77 = vpack.c.b16 %v74, %v73
  %v78 = vpack.c.b16 %v76, %v75
  %vm79 = vcmask 130048
  %v81 = vsel %vm79, %v65, 0
  %v84 = vsel %vm79, %v66, 0
  %v87 = vsel %vm79, %v67, 0
  %v90 = vsel %vm79, %v68, 0
  %v93 = vsel %vm79, %v77, 0
  %v96 = vsel %vm79, %v78, 0
  %98 = vmatprep.subr.bf16.mxu0 0
  %99 = vmatpush1.bf16.xpose.msra.mxu0 %v93
  %100 = vmatprep.subr.bf16.mxu0 0
  %101 = vmatpush1.bf16.xpose.msra.mxu0 %v96
  %102 = vmatprep.subr.bf16.mxu0 0
  %103 = vmatpush1.bf16.xpose.msra.mxu0 0
  %104 = vmatprep.subr.bf16.mxu0 0
  %105 = vmatpush1.bf16.xpose.msra.mxu0 0
  %106 = vmatprep.subr.bf16.mxu0 0
  %107 = vmatpush1.bf16.xpose.msra.mxu0 0
  %108 = vmatprep.subr.bf16.mxu0 0
  %109 = vmatpush1.bf16.xpose.msra.mxu0 0
  %110 = vmatprep.subr.bf16.mxu0 0
  %111 = vmatpush1.bf16.xpose.msra.mxu0 0
  %112 = vmatprep.subr.bf16.mxu0 0
  %113 = vmatpush1.bf16.xpose.msra.mxu0 0
  %114 = vmatprep.subr.bf16.mxu0 0
  %115 = vmatpush1.bf16.xpose.msra.mxu0 0
  %116 = vmatprep.subr.bf16.mxu0 0
  %117 = vmatpush1.bf16.xpose.msra.mxu0 0
  %118 = vmatprep.subr.bf16.mxu0 0
  %119 = vmatpush1.bf16.xpose.msra.mxu0 0
  %120 = vmatprep.subr.bf16.mxu0 0
  %121 = vmatpush1.bf16.xpose.msra.mxu0 0
  %122 = vmatprep.subr.bf16.mxu0 0
  %123 = vmatpush1.bf16.xpose.msra.mxu0 0
  %124 = vmatprep.subr.bf16.mxu0 0
  %125 = vmatpush1.bf16.xpose.msra.mxu0 0
  %126 = vmatprep.subr.bf16.mxu0 0
  %127 = vmatpush1.bf16.xpose.msra.mxu0 0
  %128 = vmatprep.subr.bf16.mxu0 0
  %129 = vmatpush1.bf16.xpose.msra.mxu0 0
  %130 = vmatprep.mubr.bf16.mxu0 0
  %131 = vmatmul.mubr.bf16.gmra.mrb[0].mxu0 %v81
  %v132 = vpop.f32.mrb[0].mxu0
  %v133 = vadd.f32 %v47, %v132
  %v134 = vpop.f32.mrb[0].mxu0
  %v135 = vpop.f32.mrb[0].mxu0
  %v136 = vadd.f32 %v47, %v135
  %v137 = vpop.f32.mrb[0].mxu0
  %138 = vmatprep.mubr.bf16.mxu0 0
  %139 = vmatmul.mubr.bf16.gmra.mrb[0].mxu0 %v84
  %v140 = vpop.f32.mrb[0].mxu0
  %v141 = vadd.f32 %v47, %v140
  %v142 = vpop.f32.mrb[0].mxu0
  %v143 = vpop.f32.mrb[0].mxu0
  %v144 = vadd.f32 %v47, %v143
  %v145 = vpop.f32.mrb[0].mxu0
  %146 = vmatprep.mubr.bf16.mxu0 0
  %147 = vmatmul.mubr.bf16.gmra.mrb[0].mxu0 %v87
  %v148 = vpop.f32.mrb[0].mxu0
  %v149 = vadd.f32 %v47, %v148
  %v150 = vpop.f32.mrb[0].mxu0
  %v151 = vpop.f32.mrb[0].mxu0
  %v152 = vadd.f32 %v47, %v151
  %v153 = vpop.f32.mrb[0].mxu0
  %154 = vmatprep.mubr.bf16.mxu0 0
  %155 = vmatmul.mubr.bf16.gmra.mrb[0].mxu0 %v90
  %v156 = vpop.f32.mrb[0].mxu0
  %v157 = vadd.f32 %v47, %v156
  %v158 = vpop.f32.mrb[0].mxu0
  %v159 = vpop.f32.mrb[0].mxu0
  %v160 = vadd.f32 %v47, %v159
  %v161 = vpop.f32.mrb[0].mxu0
  %162 = vdwg.mxu0
  %v163 = vmax.f32 %v133, 0.0
  %v164 = vmax.f32 %v136, 0.0
  %v165 = vmax.f32 %v141, 0.0
  %v166 = vmax.f32 %v144, 0.0
  %v167 = vmax.f32 %v149, 0.0
  %v168 = vmax.f32 %v152, 0.0
  %v169 = vmax.f32 %v157, 0.0
  %v170 = vmax.f32 %v160, 0.0
  %v171 = vpack.c.bf16 %v164, %v163
  %v172 = vpack.c.bf16 %v166, %v165
  %v173 = vpack.c.bf16 %v168, %v167
  %v174 = vpack.c.bf16 %v170, %v169
  %v175 = vld [vmem:[%s3] sm:$0xff]
  %v176 = vld [vmem:[%s3 + $0x8] sm:$0xff]
  %v177 = vld [vmem:[%s3 + $0x10] sm:$0xff]
  %v178 = vld [vmem:[%s3 + $0x18] sm:$0xff]
  %v179 = vld [vmem:[%s3 + $0x20] sm:$0xff]
  %v180 = vld [vmem:[%s3 + $0x28] sm:$0xff]
  %v181 = vld [vmem:[%s3 + $0x30] sm:$0xff]
  %v182 = vld [vmem:[%s3 + $0x38] sm:$0xff]
  %v191 = vunpack.c.l.b16 %v175
  %v192 = vunpack.c.h.b16 %v175
  %v193 = vunpack.c.l.b16 %v176
  %v194 = vunpack.c.h.b16 %v176
  %v195 = vunpack.c.l.b16 %v177
  %v196 = vunpack.c.h.b16 %v177
  %v197 = vunpack.c.l.b16 %v178
  %v198 = vunpack.c.h.b16 %v178
  %v199 = vunpack.c.l.b16 %v179
  %v200 = vunpack.c.h.b16 %v179
  %v201 = vunpack.c.l.b16 %v180
  %v202 = vunpack.c.h.b16 %v180
  %v203 = vunpack.c.l.b16 %v181
  %v204 = vunpack.c.h.b16 %v181
  %v205 = vunpack.c.l.b16 %v182
  %v206 = vunpack.c.h.b16 %v182
  %v207 = vpack.c.b16 %v195, %v191
  %v208 = vpack.c.b16 %v196, %v192
  %v209 = vpack.c.b16 %v197, %v193
  %v210 = vpack.c.b16 %v198, %v194
  %v211 = vpack.c.b16 %v203, %v199
  %v212 = vpack.c.b16 %v204, %v200
  %v213 = vpack.c.b16 %v205, %v201
  %v214 = vpack.c.b16 %v206, %v202
  %vm223 = vcmask 261120
  %v225 = vsel %vm223, %v171, 0
  %v228 = vsel %vm223, %v172, 0
  %v231 = vsel %vm223, %v173, 0
  %v234 = vsel %vm223, %v174, 0
  %236 = vmatprep.subr.bf16.mxu0 %v208
  %237 = vmatpush1.bf16.msra.mxu0 %v207
  %238 = vmatprep.subr.bf16.mxu0 %v212
  %239 = vmatpush1.bf16.msra.mxu0 %v211
  %240 = vmatprep.subr.bf16.mxu0 0
  %241 = vmatpush1.bf16.msra.mxu0 0
  %242 = vmatprep.subr.bf16.mxu0 0
  %243 = vmatpush1.bf16.msra.mxu0 0
  %244 = vmatprep.subr.bf16.mxu0 0
  %245 = vmatpush1.bf16.msra.mxu0 0
  %246 = vmatprep.subr.bf16.mxu0 0
  %247 = vmatpush1.bf16.msra.mxu0 0
  %248 = vmatprep.subr.bf16.mxu0 0
  %249 = vmatpush1.bf16.msra.mxu0 0
  %250 = vmatprep.subr.bf16.mxu0 0
  %251 = vmatpush1.bf16.msra.mxu0 0
  %252 = vmatprep.subr.bf16.mxu0 0
  %253 = vmatpush1.bf16.msra.mxu0 0
  %254 = vmatprep.subr.bf16.mxu0 0
  %255 = vmatpush1.bf16.msra.mxu0 0
  %256 = vmatprep.subr.bf16.mxu0 0
  %257 = vmatpush1.bf16.msra.mxu0 0
  %258 = vmatprep.subr.bf16.mxu0 0
  %259 = vmatpush1.bf16.msra.mxu0 0
  %260 = vmatprep.subr.bf16.mxu0 0
  %261 = vmatpush1.bf16.msra.mxu0 0
  %262 = vmatprep.subr.bf16.mxu0 0
  %263 = vmatpush1.bf16.msra.mxu0 0
  %264 = vmatprep.subr.bf16.mxu0 0
  %265 = vmatpush1.bf16.msra.mxu0 0
  %266 = vmatprep.subr.bf16.mxu0 0
  %267 = vmatpush1.bf16.msra.mxu0 0
  %268 = vmatprep.mubr.bf16.mxu0 0
  %269 = vmatmul.mubr.bf16.gmra.mrb[0].mxu0 %v225
  %v270 = vpop.f32.mrb[0].mxu0
  %v271 = vadd.f32 0.0, %v270
  %v272 = vpop.f32.mrb[0].mxu0
  %v273 = vadd.f32 0.0, %v272
  %v274 = vpop.f32.mrb[0].mxu0
  %v275 = vadd.f32 0.0, %v274
  %v276 = vpop.f32.mrb[0].mxu0
  %v277 = vadd.f32 0.0, %v276
  %278 = vmatprep.mubr.bf16.mxu0 0
  %279 = vmatmul.mubr.bf16.gmra.mrb[0].mxu0 %v228
  %v280 = vpop.f32.mrb[0].mxu0
  %v281 = vadd.f32 0.0, %v280
  %v282 = vpop.f32.mrb[0].mxu0
  %v283 = vadd.f32 0.0, %v282
  %v284 = vpop.f32.mrb[0].mxu0
  %v285 = vadd.f32 0.0, %v284
  %v286 = vpop.f32.mrb[0].mxu0
  %v287 = vadd.f32 0.0, %v286
  %288 = vmatprep.mubr.bf16.mxu0 0
  %289 = vmatmul.mubr.bf16.gmra.mrb[0].mxu0 %v231
  %v290 = vpop.f32.mrb[0].mxu0
  %v291 = vadd.f32 0.0, %v290
  %v292 = vpop.f32.mrb[0].mxu0
  %v293 = vadd.f32 0.0, %v292
  %v294 = vpop.f32.mrb[0].mxu0
  %v295 = vadd.f32 0.0, %v294
  %v296 = vpop.f32.mrb[0].mxu0
  %v297 = vadd.f32 0.0, %v296
  %298 = vmatprep.mubr.bf16.mxu0 0
  %299 = vmatmul.mubr.bf16.gmra.mrb[0].mxu0 %v234
  %v300 = vpop.f32.mrb[0].mxu0
  %v301 = vadd.f32 0.0, %v300
  %v302 = vpop.f32.mrb[0].mxu0
  %v303 = vadd.f32 0.0, %v302
  %v304 = vpop.f32.mrb[0].mxu0
  %v305 = vadd.f32 0.0, %v304
  %v306 = vpop.f32.mrb[0].mxu0
  %v307 = vadd.f32 0.0, %v306
  %308 = vdwg.mxu0
  %309 = vmatprep.subr.bf16.mxu0 %v210
  %310 = vmatpush1.bf16.msra.mxu0 %v209
  %311 = vmatprep.subr.bf16.mxu0 %v214
  %312 = vmatpush1.bf16.msra.mxu0 %v213
  %313 = vmatprep.subr.bf16.mxu0 0
  %314 = vmatpush1.bf16.msra.mxu0 0
  %315 = vmatprep.subr.bf16.mxu0 0
  %316 = vmatpush1.bf16.msra.mxu0 0
  %317 = vmatprep.subr.bf16.mxu0 0
  %318 = vmatpush1.bf16.msra.mxu0 0
  %319 = vmatprep.subr.bf16.mxu0 0
  %320 = vmatpush1.bf16.msra.mxu0 0
  %321 = vmatprep.subr.bf16.mxu0 0
  %322 = vmatpush1.bf16.msra.mxu0 0
  %323 = vmatprep.subr.bf16.mxu0 0
  %324 = vmatpush1.bf16.msra.mxu0 0
  %325 = vmatprep.subr.bf16.mxu0 0
  %326 = vmatpush1.bf16.msra.mxu0 0
  %327 = vmatprep.subr.bf16.mxu0 0
  %328 = vmatpush1.bf16.msra.mxu0 0
  %329 = vmatprep.subr.bf16.mxu0 0
  %330 = vmatpush1.bf16.msra.mxu0 0
  %331 = vmatprep.subr.bf16.mxu0 0
  %332 = vmatpush1.bf16.msra.mxu0 0
  %333 = vmatprep.subr.bf16.mxu0 0
  %334 = vmatpush1.bf16.msra.mxu0 0
  %335 = vmatprep.subr.bf16.mxu0 0
  %336 = vmatpush1.bf16.msra.mxu0 0
  %337 = vmatprep.subr.bf16.mxu0 0
  %338 = vmatpush1.bf16.msra.mxu0 0
  %339 = vmatprep.subr.bf16.mxu0 0
  %340 = vmatpush1.bf16.msra.mxu0 0
  %341 = vmatprep.mubr.bf16.mxu0 0
  %342 = vmatmul.mubr.bf16.gmra.mrb[0].mxu0 %v225
  %v343 = vpop.f32.mrb[0].mxu0
  %v344 = vadd.f32 0.0, %v343
  %v345 = vpop.f32.mrb[0].mxu0
  %v346 = vadd.f32 0.0, %v345
  %v347 = vpop.f32.mrb[0].mxu0
  %v348 = vadd.f32 0.0, %v347
  %v349 = vpop.f32.mrb[0].mxu0
  %v350 = vadd.f32 0.0, %v349
  %351 = vmatprep.mubr.bf16.mxu0 0
  %352 = vmatmul.mubr.bf16.gmra.mrb[0].mxu0 %v228
  %v353 = vpop.f32.mrb[0].mxu0
  %v354 = vadd.f32 0.0, %v353
  %v355 = vpop.f32.mrb[0].mxu0
  %v356 = vadd.f32 0.0, %v355
  %v357 = vpop.f32.mrb[0].mxu0
  %v358 = vadd.f32 0.0, %v357
  %v359 = vpop.f32.mrb[0].mxu0
  %v360 = vadd.f32 0.0, %v359
  %361 = vmatprep.mubr.bf16.mxu0 0
  %362 = vmatmul.mubr.bf16.gmra.mrb[0].mxu0 %v231
  %v363 = vpop.f32.mrb[0].mxu0
  %v364 = vadd.f32 0.0, %v363
  %v365 = vpop.f32.mrb[0].mxu0
  %v366 = vadd.f32 0.0, %v365
  %v367 = vpop.f32.mrb[0].mxu0
  %v368 = vadd.f32 0.0, %v367
  %v369 = vpop.f32.mrb[0].mxu0
  %v370 = vadd.f32 0.0, %v369
  %371 = vmatprep.mubr.bf16.mxu0 0
  %372 = vmatmul.mubr.bf16.gmra.mrb[0].mxu0 %v234
  %v373 = vpop.f32.mrb[0].mxu0
  %v374 = vadd.f32 0.0, %v373
  %v375 = vpop.f32.mrb[0].mxu0
  %v376 = vadd.f32 0.0, %v375
  %v377 = vpop.f32.mrb[0].mxu0
  %v378 = vadd.f32 0.0, %v377
  %v379 = vpop.f32.mrb[0].mxu0
  %v380 = vadd.f32 0.0, %v379
  %381 = vdwg.mxu0
  %v382 = vld [vmem:[%s4] sm:$0xf]
  %v384 = vlaneseq
  %v385 = vshrl.u32 %v384, 7
  %v386 = vsub.s32 0, %v385
  %v387 = vrot.slane %v382, %v386
  %v388 = vlaneseq
  %v389 = vshrl.u32 %v388, 7
  %v390 = vsub.s32 1, %v389
  %v391 = vrot.slane %v382, %v390
  %v392 = vlaneseq
  %v393 = vshrl.u32 %v392, 7
  %v394 = vsub.s32 2, %v393
  %v395 = vrot.slane %v382, %v394
  %v396 = vlaneseq
  %v397 = vshrl.u32 %v396, 7
  %v398 = vsub.s32 3, %v397
  %v399 = vrot.slane %v382, %v398
  %v404 = vmul.f32 %v271, %v387
  %v405 = vmul.f32 %v273, %v391
  %v406 = vmul.f32 %v344, %v395
  %v407 = vmul.f32 %v346, %v399
  %v408 = vmul.f32 %v275, %v387
  %v409 = vmul.f32 %v277, %v391
  %v410 = vmul.f32 %v348, %v395
  %v411 = vmul.f32 %v350, %v399
  %v412 = vmul.f32 %v281, %v387
  %v413 = vmul.f32 %v283, %v391
  %v414 = vmul.f32 %v354, %v395
  %v415 = vmul.f32 %v356, %v399
  %v416 = vmul.f32 %v285, %v387
  %v417 = vmul.f32 %v287, %v391
  %v418 = vmul.f32 %v358, %v395
  %v419 = vmul.f32 %v360, %v399
  %v420 = vmul.f32 %v291, %v387
  %v421 = vmul.f32 %v293, %v391
  %v422 = vmul.f32 %v364, %v395
  %v423 = vmul.f32 %v366, %v399
  %v424 = vmul.f32 %v295, %v387
  %v425 = vmul.f32 %v297, %v391
  %v426 = vmul.f32 %v368, %v395
  %v427 = vmul.f32 %v370, %v399
  %v428 = vmul.f32 %v301, %v387
  %v429 = vmul.f32 %v303, %v391
  %v430 = vmul.f32 %v374, %v395
  %v431 = vmul.f32 %v376, %v399
  %v432 = vmul.f32 %v305, %v387
  %v433 = vmul.f32 %v307, %v391
  %v434 = vmul.f32 %v378, %v395
  %v435 = vmul.f32 %v380, %v399
  %v436 = vld [vmem:[%s5] sm:$0xf]
  %v438 = vlaneseq
  %v439 = vshrl.u32 %v438, 7
  %v440 = vsub.s32 0, %v439
  %v441 = vrot.slane %v436, %v440
  %v442 = vlaneseq
  %v443 = vshrl.u32 %v442, 7
  %v444 = vsub.s32 1, %v443
  %v445 = vrot.slane %v436, %v444
  %v446 = vlaneseq
  %v447 = vshrl.u32 %v446, 7
  %v448 = vsub.s32 2, %v447
  %v449 = vrot.slane %v436, %v448
  %v450 = vlaneseq
  %v451 = vshrl.u32 %v450, 7
  %v452 = vsub.s32 3, %v451
  %v453 = vrot.slane %v436, %v452
  %v458 = vadd.f32 %v404, %v441
  %v459 = vadd.f32 %v405, %v445
  %v460 = vadd.f32 %v406, %v449
  %v461 = vadd.f32 %v407, %v453
  %v462 = vadd.f32 %v408, %v441
  %v463 = vadd.f32 %v409, %v445
  %v464 = vadd.f32 %v410, %v449
  %v465 = vadd.f32 %v411, %v453
  %v466 = vadd.f32 %v412, %v441
  %v467 = vadd.f32 %v413, %v445
  %v468 = vadd.f32 %v414, %v449
  %v469 = vadd.f32 %v415, %v453
  %v470 = vadd.f32 %v416, %v441
  %v471 = vadd.f32 %v417, %v445
  %v472 = vadd.f32 %v418, %v449
  %v473 = vadd.f32 %v419, %v453
  %v474 = vadd.f32 %v420, %v441
  %v475 = vadd.f32 %v421, %v445
  %v476 = vadd.f32 %v422, %v449
  %v477 = vadd.f32 %v423, %v453
  %v478 = vadd.f32 %v424, %v441
  %v479 = vadd.f32 %v425, %v445
  %v480 = vadd.f32 %v426, %v449
  %v481 = vadd.f32 %v427, %v453
  %v482 = vadd.f32 %v428, %v441
  %v483 = vadd.f32 %v429, %v445
  %v484 = vadd.f32 %v430, %v449
  %v485 = vadd.f32 %v431, %v453
  %v486 = vadd.f32 %v432, %v441
  %v487 = vadd.f32 %v433, %v445
  %v488 = vadd.f32 %v434, %v449
  %v489 = vadd.f32 %v435, %v453
  %v490 = vpack.c.bf16 %v462, %v458
  %v491 = vpack.c.bf16 %v463, %v459
  %v492 = vpack.c.bf16 %v464, %v460
  %v493 = vpack.c.bf16 %v465, %v461
  %v494 = vpack.c.bf16 %v470, %v466
  %v495 = vpack.c.bf16 %v471, %v467
  %v496 = vpack.c.bf16 %v472, %v468
  %v497 = vpack.c.bf16 %v473, %v469
  %v498 = vpack.c.bf16 %v478, %v474
  %v499 = vpack.c.bf16 %v479, %v475
  %v500 = vpack.c.bf16 %v480, %v476
  %v501 = vpack.c.bf16 %v481, %v477
  %v502 = vpack.c.bf16 %v486, %v482
  %v503 = vpack.c.bf16 %v487, %v483
  %v504 = vpack.c.bf16 %v488, %v484
  %v505 = vpack.c.bf16 %v489, %v485
  %v506 = vld [vmem:[%s6] sm:$0xff]
  %v508 = vcombine.high %v506, %v506
  %v510 = vunpack.c.l.s4 1983009808
  %v511 = vunpack.c.0.s8 %v510
  %v512 = vlaneseq
  %v513 = vshrl.u32 %v512, 7
  %v514 = vsub.s32 %v511, %v513
  %v515 = vrot.slane %v506, %v514
  %v517 = vunpack.c.l.s4 1983009808
  %v518 = vunpack.c.0.s8 %v517
  %v519 = vlaneseq
  %v520 = vshrl.u32 %v519, 7
  %v521 = vsub.s32 %v518, %v520
  %v522 = vrot.slane %v508, %v521
  %v523 = vcombine.high %v515, %v515
  %v524 = vcombine.high %v522, %v522
  %529 = vmatprep.subr.bf16.mxu0 %v523
  %530 = vmatpush1.bf16.xpose.msra.mxu0 %v515
  %531 = vmatprep.subr.bf16.mxu0 0
  %532 = vmatpush1.bf16.xpose.msra.mxu0 0
  %533 = vmatprep.subr.bf16.mxu0 0
  %534 = vmatpush1.bf16.xpose.msra.mxu0 0
  %535 = vmatprep.subr.bf16.mxu0 0
  %536 = vmatpush1.bf16.xpose.msra.mxu0 0
  %537 = vmatprep.subr.bf16.mxu0 0
  %538 = vmatpush1.bf16.xpose.msra.mxu0 0
  %539 = vmatprep.subr.bf16.mxu0 0
  %540 = vmatpush1.bf16.xpose.msra.mxu0 0
  %541 = vmatprep.subr.bf16.mxu0 0
  %542 = vmatpush1.bf16.xpose.msra.mxu0 0
  %543 = vmatprep.subr.bf16.mxu0 0
  %544 = vmatpush1.bf16.xpose.msra.mxu0 0
  %545 = vmatprep.subr.bf16.mxu0 0
  %546 = vmatpush1.bf16.xpose.msra.mxu0 0
  %547 = vmatprep.subr.bf16.mxu0 0
  %548 = vmatpush1.bf16.xpose.msra.mxu0 0
  %549 = vmatprep.subr.bf16.mxu0 0
  %550 = vmatpush1.bf16.xpose.msra.mxu0 0
  %551 = vmatprep.subr.bf16.mxu0 0
  %552 = vmatpush1.bf16.xpose.msra.mxu0 0
  %553 = vmatprep.subr.bf16.mxu0 0
  %554 = vmatpush1.bf16.xpose.msra.mxu0 0
  %555 = vmatprep.subr.bf16.mxu0 0
  %556 = vmatpush1.bf16.xpose.msra.mxu0 0
  %557 = vmatprep.subr.bf16.mxu0 0
  %558 = vmatpush1.bf16.xpose.msra.mxu0 0
  %559 = vmatprep.subr.bf16.mxu0 0
  %560 = vmatpush1.bf16.xpose.msra.mxu0 0
  %561 = vmatprep.mubr.bf16.mxu0 %v491
  %562 = vmatmul.mubr.bf16.gmra.mrb[0].mxu0 %v490
  %v563 = vpop.f32.mrb[0].mxu0
  %v564 = vadd.f32 0.0, %v563
  %v565 = vpop.f32.mrb[0].mxu0
  %v566 = vpop.f32.mrb[0].mxu0
  %v567 = vadd.f32 0.0, %v566
  %v568 = vpop.f32.mrb[0].mxu0
  %569 = vmatprep.mubr.bf16.mxu0 %v495
  %570 = vmatmul.mubr.bf16.gmra.mrb[0].mxu0 %v494
  %v571 = vpop.f32.mrb[0].mxu0
  %v572 = vadd.f32 0.0, %v571
  %v573 = vpop.f32.mrb[0].mxu0
  %v574 = vpop.f32.mrb[0].mxu0
  %v575 = vadd.f32 0.0, %v574
  %v576 = vpop.f32.mrb[0].mxu0
  %577 = vmatprep.mubr.bf16.mxu0 %v499
  %578 = vmatmul.mubr.bf16.gmra.mrb[0].mxu0 %v498
  %v579 = vpop.f32.mrb[0].mxu0
  %v580 = vadd.f32 0.0, %v579
  %v581 = vpop.f32.mrb[0].mxu0
  %v582 = vpop.f32.mrb[0].mxu0
  %v583 = vadd.f32 0.0, %v582
  %v584 = vpop.f32.mrb[0].mxu0
  %585 = vmatprep.mubr.bf16.mxu0 %v503
  %586 = vmatmul.mubr.bf16.gmra.mrb[0].mxu0 %v502
  %v587 = vpop.f32.mrb[0].mxu0
  %v588 = vadd.f32 0.0, %v587
  %v589 = vpop.f32.mrb[0].mxu0
  %v590 = vpop.f32.mrb[0].mxu0
  %v591 = vadd.f32 0.0, %v590
  %v592 = vpop.f32.mrb[0].mxu0
  %593 = vdwg.mxu0
  %594 = vmatprep.subr.bf16.mxu0 %v524
  %595 = vmatpush1.bf16.xpose.msra.mxu0 %v522
  %596 = vmatprep.subr.bf16.mxu0 0
  %597 = vmatpush1.bf16.xpose.msra.mxu0 0
  %598 = vmatprep.subr.bf16.mxu0 0
  %599 = vmatpush1.bf16.xpose.msra.mxu0 0
  %600 = vmatprep.subr.bf16.mxu0 0
  %601 = vmatpush1.bf16.xpose.msra.mxu0 0
  %602 = vmatprep.subr.bf16.mxu0 0
  %603 = vmatpush1.bf16.xpose.msra.mxu0 0
  %604 = vmatprep.subr.bf16.mxu0 0
  %605 = vmatpush1.bf16.xpose.msra.mxu0 0
  %606 = vmatprep.subr.bf16.mxu0 0
  %607 = vmatpush1.bf16.xpose.msra.mxu0 0
  %608 = vmatprep.subr.bf16.mxu0 0
  %609 = vmatpush1.bf16.xpose.msra.mxu0 0
  %610 = vmatprep.subr.bf16.mxu0 0
  %611 = vmatpush1.bf16.xpose.msra.mxu0 0
  %612 = vmatprep.subr.bf16.mxu0 0
  %613 = vmatpush1.bf16.xpose.msra.mxu0 0
  %614 = vmatprep.subr.bf16.mxu0 0
  %615 = vmatpush1.bf16.xpose.msra.mxu0 0
  %616 = vmatprep.subr.bf16.mxu0 0
  %617 = vmatpush1.bf16.xpose.msra.mxu0 0
  %618 = vmatprep.subr.bf16.mxu0 0
  %619 = vmatpush1.bf16.xpose.msra.mxu0 0
  %620 = vmatprep.subr.bf16.mxu0 0
  %621 = vmatpush1.bf16.xpose.msra.mxu0 0
  %622 = vmatprep.subr.bf16.mxu0 0
  %623 = vmatpush1.bf16.xpose.msra.mxu0 0
  %624 = vmatprep.subr.bf16.mxu0 0
  %625 = vmatpush1.bf16.xpose.msra.mxu0 0
  %626 = vmatprep.mubr.bf16.mxu0 %v493
  %627 = vmatmul.mubr.bf16.gmra.mrb[0].mxu0 %v492
  %v628 = vpop.f32.mrb[0].mxu0
  %v629 = vadd.f32 %v564, %v628
  %v630 = vpop.f32.mrb[0].mxu0
  %v631 = vpop.f32.mrb[0].mxu0
  %v632 = vadd.f32 %v567, %v631
  %v633 = vpop.f32.mrb[0].mxu0
  %634 = vmatprep.mubr.bf16.mxu0 %v497
  %635 = vmatmul.mubr.bf16.gmra.mrb[0].mxu0 %v496
  %v636 = vpop.f32.mrb[0].mxu0
  %v637 = vadd.f32 %v572, %v636
  %v638 = vpop.f32.mrb[0].mxu0
  %v639 = vpop.f32.mrb[0].mxu0
  %v640 = vadd.f32 %v575, %v639
  %v641 = vpop.f32.mrb[0].mxu0
  %642 = vmatprep.mubr.bf16.mxu0 %v501
  %643 = vmatmul.mubr.bf16.gmra.mrb[0].mxu0 %v500
  %v644 = vpop.f32.mrb[0].mxu0
  %v645 = vadd.f32 %v580, %v644
  %v646 = vpop.f32.mrb[0].mxu0
  %v647 = vpop.f32.mrb[0].mxu0
  %v648 = vadd.f32 %v583, %v647
  %v649 = vpop.f32.mrb[0].mxu0
  %650 = vmatprep.mubr.bf16.mxu0 %v505
  %651 = vmatmul.mubr.bf16.gmra.mrb[0].mxu0 %v504
  %v652 = vpop.f32.mrb[0].mxu0
  %v653 = vadd.f32 %v588, %v652
  %v654 = vpop.f32.mrb[0].mxu0
  %v655 = vpop.f32.mrb[0].mxu0
  %v656 = vadd.f32 %v591, %v655
  %v657 = vpop.f32.mrb[0].mxu0
  %658 = vdwg.mxu0
  %v659 = vmul.f32 %v629, 0.03125
  %v660 = vmul.f32 %v632, 0.03125
  %v661 = vmul.f32 %v637, 0.03125
  %v662 = vmul.f32 %v640, 0.03125
  %v663 = vmul.f32 %v645, 0.03125
  %v664 = vmul.f32 %v648, 0.03125
  %v665 = vmul.f32 %v653, 0.03125
  %v666 = vmul.f32 %v656, 0.03125
  %v667 = vld [vmem:[%s7] sm:$0x1]
  %v669 = vlaneseq
  %v670 = vshrl.u32 %v669, 7
  %v671 = vsub.s32 0, %v670
  %v672 = vrot.slane %v667, %v671
  %v674 = vadd.f32 %v659, %v672
  %v675 = vadd.f32 %v660, %v672
  %v676 = vadd.f32 %v661, %v672
  %v677 = vadd.f32 %v662, %v672
  %v678 = vadd.f32 %v663, %v672
  %v679 = vadd.f32 %v664, %v672
  %v680 = vadd.f32 %v665, %v672
  %v681 = vadd.f32 %v666, %v672
  %vm682 = vcmask 31744
  %683 = vst.msk [vmem:[%s8] sm:$0xff] %vm682, %v674
  %684 = vst.msk [vmem:[%s8 + $0x8] sm:$0xff] %vm682, %v675
  %685 = vst.msk [vmem:[%s8 + $0x10] sm:$0xff] %vm682, %v676
  %686 = vst.msk [vmem:[%s8 + $0x18] sm:$0xff] %vm682, %v677
  %687 = vst.msk [vmem:[%s8 + $0x20] sm:$0xff] %vm682, %v678
  %688 = vst.msk [vmem:[%s8 + $0x28] sm:$0xff] %vm682, %v679
  %689 = vst.msk [vmem:[%s8 + $0x30] sm:$0xff] %vm682, %v680
  %690 = vst.msk [vmem:[%s8 + $0x38] sm:$0xff] %vm682, %v681
  // Predicated region
  $region34: #{tpu_custom_call.1} parent=0 // pred_check
    _
  $region35: #{tpu_custom_call.1} parent=0 // pred_check_branch
    %692 = sbr.rel (0) target = $region37
  $region36: #{tpu_custom_call.1} parent=0 // pred_region
    _
  $region37: #{tpu_custom_call.1} parent=0 // pred_fallthru
    _
  // Predicated region
  $region38: #{tpu_custom_call.1} parent=0 // pred_check
    _
  $region39: #{tpu_custom_call.1} parent=0 // pred_check_branch
    %694 = sbr.rel (0) target = $region41
  $region40: #{tpu_custom_call.1} parent=0 // pred_region
    _
  $region41: #{tpu_custom_call.1} parent=0 // pred_fallthru
    _

</llo_original>
